<compile_context>
chip_gen: v7x
topology: tpu7x:2x2x1
jax: 0.10.0
libtpu: 0.0.40
codegen_flags: <defaults>
</compile_context>

<pallas_src>
import functools

import jax
import jax.numpy as jnp
from jax import lax
from jax.experimental import pallas as pl
from jax.experimental.pallas import tpu as pltpu

LANES = 128
SUBLANES = 8


def _soft_iou_partials_kernel(pred_ref, target_ref, out_ref, *,
                              block_rows, chunk_rows, rows_valid,
                              steps_per_split, need_mask):
    """Accumulate (I, S) partial sums into the resident output block.

    out_ref block shape: (1, 2, 8, 128); channel 0 = sum(pred * target),
    channel 1 = sum(pred + target).
    """
    s = pl.program_id(0)          # split index (outer axis)
    j = pl.program_id(1)          # streaming / reduction step (arbitrary)

    @pl.when(j == 0)
    def _init():
        out_ref[...] = jnp.zeros_like(out_ref)

    num_chunks = block_rows // chunk_rows
    folds = chunk_rows // SUBLANES

    def accumulate(mask_fn):
        # Chunked accumulation: temporaries are capped at a few vregs per
        # iteration regardless of block_rows (keeps VMEM scratch flat).
        def body(c, carry):
            acc_i, acc_s = carry
            r0 = pl.multiple_of(c * chunk_rows, chunk_rows)
            p = pred_ref[pl.ds(r0, chunk_rows), :].astype(jnp.float32)
            t = target_ref[pl.ds(r0, chunk_rows), :].astype(jnp.float32)
            if mask_fn is not None:
                valid = mask_fn(r0)
                p = jnp.where(valid, p, 0.0)
                t = jnp.where(valid, t, 0.0)
            inter = p * t
            both = p + t
            if folds > 1:
                # Splits only the sublane-major axis -> layout-free reshape.
                inter = inter.reshape(folds, SUBLANES, LANES).sum(axis=0)
                both = both.reshape(folds, SUBLANES, LANES).sum(axis=0)
            return acc_i + inter, acc_s + both

        zeros = jnp.zeros((SUBLANES, LANES), jnp.float32)
        acc_i, acc_s = lax.fori_loop(0, num_chunks, body, (zeros, zeros),
                                     unroll=True)
        out_ref[0, 0, :, :] += acc_i
        out_ref[0, 1, :, :] += acc_s

    if not need_mask:
        accumulate(None)
    else:
        # Only blocks that overhang the valid row range take the masked
        # (slower) path; steady-state blocks run completely unmasked.
        block_global = s * steps_per_split + j
        tile_row0 = block_global * block_rows
        is_ragged = tile_row0 + block_rows > rows_valid

        @pl.when(jnp.logical_not(is_ragged))
        def _fast():
            accumulate(None)

        @pl.when(is_ragged)
        def _masked():
            def mask_fn(r0):
                # Mask is keyed to the grid-derived global row index so the
                # clamped overhang blocks (which re-read the last valid tile)
                # contribute exactly zero.
                row_ids = (tile_row0 + r0
                           + lax.broadcasted_iota(jnp.int32,
                                                  (chunk_rows, LANES), 0))
                return row_ids < rows_valid

            accumulate(mask_fn)


@functools.partial(jax.jit,
                   static_argnames=("block_rows", "splits", "vmem_limit_bytes"))
def soft_iou_loss(pred, target, *, block_rows=8192, splits=1,
                  vmem_limit_bytes=40 * 1024 * 1024):
    # block_rows=8192 -> 4 MiB f32 per input tile, 16 MiB double-buffered for
    # both inputs; vmem_limit_bytes=40 MiB leaves headroom on v7x (64 MiB
    # physical) and overrides the tighter default scoped limits on v5e/v6e.
    assert block_rows > 0 and block_rows % SUBLANES == 0

    # (N, 1, H, W) -> (N, H, W), same as tensor.squeeze(dim=1).
    if pred.ndim == target.ndim + 1 and pred.shape[1] == 1:
        pred = jnp.squeeze(pred, axis=1)
    assert pred.shape == target.shape, (pred.shape, target.shape)

    total = pred.size
    rows_raw = pl.cdiv(total, LANES)

    if rows_raw > block_rows:
        # Large input: stream it as-is; ragged row tail is masked in-kernel.
        rows = rows_raw
    else:
        # Small input (fits one tile): round rows up to a sublane multiple so
        # the vreg-fold path applies.  The pad copy here is tiny.
        rows = max(SUBLANES, ((rows_raw + SUBLANES - 1) // SUBLANES) * SUBLANES)

    padded = rows * LANES
    if padded == total:
        prep = lambda x: x.reshape(rows, LANES)          # free reshape
    else:
        # TODO(synk): non-128-aligned element counts still take a wrapper pad
        # copy (one extra HBM pass); an in-kernel lane mask of the final
        # partial row would remove it.
        prep = lambda x: jnp.pad(x.reshape(-1),
                                 (0, padded - total)).reshape(rows, LANES)

    p2d = prep(pred)
    t2d = prep(target)

    block_rows_eff = min(block_rows, rows)
    total_blocks = pl.cdiv(rows, block_rows_eff)

    num_splits = max(1, min(splits, total_blocks))
    steps_per_split = pl.cdiv(total_blocks, num_splits)
    need_mask = (num_splits * steps_per_split * block_rows_eff != rows)

    # Largest chunk size (<= 512 rows) that divides the tile; always >= 8.
    chunk_rows = SUBLANES
    for cand in (512, 256, 128, 64, 32, 16, 8):
        if block_rows_eff % cand == 0:
            chunk_rows = cand
            break

    def in_index_map(s_, j_):
        # Clamp overhanging (s, j) combinations onto the last valid block so
        # no out-of-bounds DMA is issued; their contribution is zeroed by the
        # in-kernel row mask.
        return (jnp.minimum(s_ * steps_per_split + j_, total_blocks - 1), 0)

    kernel = functools.partial(
        _soft_iou_partials_kernel,
        block_rows=block_rows_eff,
        chunk_rows=chunk_rows,
        rows_valid=rows,
        steps_per_split=steps_per_split,
        need_mask=need_mask,
    )

    itemsize_p = jnp.dtype(p2d.dtype).itemsize
    itemsize_t = jnp.dtype(t2d.dtype).itemsize
    cost = pl.CostEstimate(
        flops=3 * padded,
        transcendentals=0,
        bytes_accessed=padded * (itemsize_p + itemsize_t)
        + num_splits * 2 * SUBLANES * LANES * 4,
    )

    partials = pl.pallas_call(
        kernel,
        out_shape=jax.ShapeDtypeStruct((num_splits, 2, SUBLANES, LANES),
                                       jnp.float32),
        grid_spec=pltpu.PrefetchScalarGridSpec(
            num_scalar_prefetch=0,
            grid=(num_splits, steps_per_split),
            in_specs=[
                pl.BlockSpec((block_rows_eff, LANES), in_index_map),
                pl.BlockSpec((block_rows_eff, LANES), in_index_map),
            ],
            out_specs=pl.BlockSpec((1, 2, SUBLANES, LANES),
                                   lambda s_, j_: (s_, 0, 0, 0)),
        ),
        compiler_params=pltpu.CompilerParams(
            dimension_semantics=("parallel", "arbitrary"),
            vmem_limit_bytes=vmem_limit_bytes,
        ),
        cost_estimate=cost,
    )(p2d, t2d)

    # Final cross-lane reduction + IoU math (trivial) in plain JAX.
    inter = jnp.sum(partials[:, 0])
    both = jnp.sum(partials[:, 1])           # = sum(pred) + sum(target)
    smooth = jnp.float32(1.0)
    iou = (inter + smooth) / (both - inter + smooth)
    return jnp.float32(1.0) - iou


def _reference(pred, target):
    p = jnp.squeeze(pred, axis=1).astype(jnp.float32)
    t = target.astype(jnp.float32)
    inter = jnp.sum(p * t)
    loss = (inter + 1.0) / (jnp.sum(p) + jnp.sum(t) - inter + 1.0)
    return 1.0 - loss


if __name__ == "__main__":
    key = jax.random.PRNGKey(0)
    k1, k2, k3, k4, k5, k6 = jax.random.split(key, 6)

    # Case 1: sigmoid segmentation outputs vs. binary mask (single tile).
    N, H, W = 2, 16, 16
    pred = jax.nn.sigmoid(jax.random.normal(k1, (N, 1, H, W), dtype=jnp.float32))
    target = (jax.random.uniform(k2, (N, H, W)) > 0.5).astype(jnp.float32)

    loss = soft_iou_loss(pred, target)
    jax.block_until_ready(loss)
    ref = _reference(pred, target)
    assert jnp.allclose(loss, ref, atol=1e-5, rtol=1e-5), (loss, ref)

    # Case 2: exercises the streaming path at a small size: multiple row
    # blocks, pl.when-gated ragged-tail masking, and the 2-way split axis
    # with a clamped overhang block.
    N2, H2, W2 = 2, 40, 32
    pred2 = jax.nn.sigmoid(jax.random.normal(k3, (N2, 1, H2, W2),
                                             dtype=jnp.float32))
    target2 = (jax.random.uniform(k4, (N2, H2, W2)) > 0.5).astype(jnp.float32)

    loss2 = soft_iou_loss(pred2, target2, block_rows=8, splits=2)
    jax.block_until_ready(loss2)
    ref2 = _reference(pred2, target2)
    assert jnp.allclose(loss2, ref2, atol=1e-5, rtol=1e-5), (loss2, ref2)

    # Case 3: default parameters, single block with several unrolled chunks
    # (exercises the chunked fori_loop accumulation path).
    N3, H3, W3 = 2, 40, 64
    pred3 = jax.nn.sigmoid(jax.random.normal(k5, (N3, 1, H3, W3),
                                             dtype=jnp.float32))
    target3 = (jax.random.uniform(k6, (N3, H3, W3)) > 0.5).astype(jnp.float32)

    loss3 = soft_iou_loss(pred3, target3)
    jax.block_until_ready(loss3)
    ref3 = _reference(pred3, target3)
    assert jnp.allclose(loss3, ref3, atol=1e-5, rtol=1e-5), (loss3, ref3)

    print("KERNEL_OK")
</pallas_src>

<mosaic_0001>
module attributes {stable_mosaic.version = 11 : i64} {
  func.func @_soft_iou_partials_kernel(%arg0: i32, %arg1: i32, %arg2: memref<8x128xf32, #tpu.memory_space<vmem>>, %arg3: memref<8x128xf32, #tpu.memory_space<vmem>>, %arg4: memref<1x2x8x128xf32, #tpu.memory_space<vmem>>) attributes {dimension_semantics = [#tpu.dimension_semantics<parallel>, #tpu.dimension_semantics<arbitrary>], iteration_bounds = array<i64: 1, 1>, scalar_prefetch = 0 : i64, scratch_operands = 0 : i64, tpu.core_type = #tpu.core_type<tc>, window_params = [{transform_indices = @transform_0, window_bounds = array<i64: 8, 128>}, {transform_indices = @transform_1, window_bounds = array<i64: 8, 128>}, {transform_indices = @transform_2, window_bounds = array<i64: 1, 2, 8, 128>}]} {
    %c0_i32 = arith.constant 0 : i32
    %0 = arith.cmpi eq, %arg1, %c0_i32 : i32
    %1 = arith.extui %0 : i1 to i32
    %c0_i32_0 = arith.constant 0 : i32
    %2 = arith.cmpi ne, %1, %c0_i32_0 : i32
    scf.if %2 {
      %cst_18 = arith.constant 0.000000e+00 : f32
      %26 = vector.broadcast %cst_18 : f32 to vector<1x2x8x128xf32>
      %c0_19 = arith.constant 0 : index
      %c0_20 = arith.constant 0 : index
      %c0_21 = arith.constant 0 : index
      %c0_22 = arith.constant 0 : index
      %27 = vector.load %arg4[%c0_19, %c0_20, %c0_21, %c0_22] : memref<1x2x8x128xf32, #tpu.memory_space<vmem>>, vector<1x2x8x128xf32>
      tpu.vector_store %arg4[%c0_19, %c0_20, %c0_21, %c0_22], %26 {strides = array<i32>} : memref<1x2x8x128xf32, #tpu.memory_space<vmem>>, vector<1x2x8x128xf32>,
    } else {
    }
    %cst = arith.constant 0.000000e+00 : f32
    %3 = vector.broadcast %cst : f32 to vector<8x128xf32>
    %c0_i32_1 = arith.constant 0 : i32
    %c8_i32 = arith.constant 8 : i32
    %4 = arith.muli %c0_i32_1, %c8_i32 : i32
    %5 = tpu.assume_multiple %4, 8 : i32
    %6 = arith.index_cast %5 : i32 to index
    %c0 = arith.constant 0 : index
    %7 = vector.load %arg2[%6, %c0] : memref<8x128xf32, #tpu.memory_space<vmem>>, vector<8x128xf32>
    %8 = arith.index_cast %5 : i32 to index
    %c0_2 = arith.constant 0 : index
    %9 = vector.load %arg3[%8, %c0_2] : memref<8x128xf32, #tpu.memory_space<vmem>>, vector<8x128xf32>
    %10 = arith.mulf %7, %9 : vector<8x128xf32>
    %11 = arith.addf %7, %9 : vector<8x128xf32>
    %12 = arith.addf %3, %10 : vector<8x128xf32>
    %13 = arith.addf %3, %11 : vector<8x128xf32>
    %c1_i32 = arith.constant 1 : i32
    %c0_3 = arith.constant 0 : index
    %c0_4 = arith.constant 0 : index
    %c0_5 = arith.constant 0 : index
    %c0_6 = arith.constant 0 : index
    %14 = vector.load %arg4[%c0_3, %c0_4, %c0_5, %c0_6] : memref<1x2x8x128xf32, #tpu.memory_space<vmem>>, vector<1x1x8x128xf32>
    %15 = vector.shape_cast %14 : vector<1x1x8x128xf32> to vector<8x128xf32>
    %16 = arith.addf %15, %12 : vector<8x128xf32>
    %c0_7 = arith.constant 0 : index
    %c0_8 = arith.constant 0 : index
    %c0_9 = arith.constant 0 : index
    %c0_10 = arith.constant 0 : index
    %17 = vector.load %arg4[%c0_7, %c0_8, %c0_9, %c0_10] : memref<1x2x8x128xf32, #tpu.memory_space<vmem>>, vector<1x1x8x128xf32>
    %18 = vector.shape_cast %17 : vector<1x1x8x128xf32> to vector<8x128xf32>
    %19 = vector.shape_cast %16 : vector<8x128xf32> to vector<1x1x8x128xf32>
    tpu.vector_store %arg4[%c0_7, %c0_8, %c0_9, %c0_10], %19 {strides = array<i32>} : memref<1x2x8x128xf32, #tpu.memory_space<vmem>>, vector<1x1x8x128xf32>,
    %c0_11 = arith.constant 0 : index
    %c1 = arith.constant 1 : index
    %c0_12 = arith.constant 0 : index
    %c0_13 = arith.constant 0 : index
    %20 = vector.load %arg4[%c0_11, %c1, %c0_12, %c0_13] : memref<1x2x8x128xf32, #tpu.memory_space<vmem>>, vector<1x1x8x128xf32>
    %21 = vector.shape_cast %20 : vector<1x1x8x128xf32> to vector<8x128xf32>
    %22 = arith.addf %21, %13 : vector<8x128xf32>
    %c0_14 = arith.constant 0 : index
    %c1_15 = arith.constant 1 : index
    %c0_16 = arith.constant 0 : index
    %c0_17 = arith.constant 0 : index
    %23 = vector.load %arg4[%c0_14, %c1_15, %c0_16, %c0_17] : memref<1x2x8x128xf32, #tpu.memory_space<vmem>>, vector<1x1x8x128xf32>
    %24 = vector.shape_cast %23 : vector<1x1x8x128xf32> to vector<8x128xf32>
    %25 = vector.shape_cast %22 : vector<8x128xf32> to vector<1x1x8x128xf32>
    tpu.vector_store %arg4[%c0_14, %c1_15, %c0_16, %c0_17], %25 {strides = array<i32>} : memref<1x2x8x128xf32, #tpu.memory_space<vmem>>, vector<1x1x8x128xf32>,
    return
  }
  func.func @transform_0(%arg0: i32, %arg1: i32) -> (i32, i32) {
    %c1_i32 = arith.constant 1 : i32
    %0 = arith.muli %arg0, %c1_i32 : i32
    %1 = arith.addi %0, %arg1 : i32
    %c0_i32 = arith.constant 0 : i32
    %2 = arith.minsi %1, %c0_i32 : i32
    %c0_i32_0 = arith.constant 0 : i32
    %c0_i32_1 = arith.constant 0 : i32
    return %2, %c0_i32_0 : i32, i32
  }
  func.func @transform_1(%arg0: i32, %arg1: i32) -> (i32, i32) {
    %c1_i32 = arith.constant 1 : i32
    %0 = arith.muli %arg0, %c1_i32 : i32
    %1 = arith.addi %0, %arg1 : i32
    %c0_i32 = arith.constant 0 : i32
    %2 = arith.minsi %1, %c0_i32 : i32
    %c0_i32_0 = arith.constant 0 : i32
    %c0_i32_1 = arith.constant 0 : i32
    return %2, %c0_i32_0 : i32, i32
  }
  func.func @transform_2(%arg0: i32, %arg1: i32) -> (i32, i32, i32, i32) {
    %c0_i32 = arith.constant 0 : i32
    %c0_i32_0 = arith.constant 0 : i32
    %c0_i32_1 = arith.constant 0 : i32
    %c0_i32_2 = arith.constant 0 : i32
    return %arg0, %c0_i32, %c0_i32_0, %c0_i32_1 : i32, i32, i32, i32
  }
}

</mosaic_0001>

<llo_original>
// kernel: squeeze.3
$region0: #{squeeze.3}
  %s0 = inlined_call_operand.hbm [shape: f32[2,1,16,16], index: 0, kind: input, shape index: {}]
  %s1 = inlined_call_operand.vmem [shape: f32[512], index: 1, kind: output, shape index: {}]
  $region1: #{squeeze.3} parent=0
    #allocation0 [shape = 'u8[16384]{0}', space=vmem, size = 0x4000, scoped, tag = 'operand span for operand 0']
    #allocation1 [shape = 's32[1]{0}', space=sflag, size = 0x4, scoped, tag = 'scoped memory for squeeze.3']
    #allocation2 [shape = 'u8[4096]{0}', space=vmem, size = 0x1000, scoped, tag = 'scoped mem for output reshape']
    %2 = vsyncpa [#allocation1], 0
    %s4 = ssub.s32 512, 512
    %5 = vsyncadd [#allocation1], %s4
    %s7 = sshll.u32 [#allocation0], 4
    %s8 = int_to_ptr.vmem [resolvable:$true] %s7
    %10 = dma.hbm_to_vmem [thread:$0]  %s0, 512, %s8, [#allocation1]
    %11 = dma.done [#allocation1], 512
    %v12 = vld [vmem:[#allocation0] ss:$8 sm:$0xf]
    %vm13 = vcmask 130048
    %14 = vst.msk [vmem:[#allocation2] sm:$0xf] %vm13, %v12
    %s15 = scalar_lea.vmem [#allocation0], 7
    %v16 = vld [vmem:[%s15] ss:$8 sm:$0xf]
    %17 = vrot.lane.b32.xlu0 %v16, 112
    %v18 = vpop.permute.xlu0 %17
    %vm19 = vcmask 1048448
    %20 = vst.msk [vmem:[#allocation2] sm:$0xf] %vm19, %v18
    %s21 = scalar_lea.vmem [#allocation0], 6
    %v22 = vld [vmem:[%s21] ss:$8 sm:$0xf]
    %23 = vrot.lane.b32.xlu0 %v22, 96
    %v24 = vpop.permute.xlu0 %23
    %vm25 = vcmask 917248
    %26 = vst.msk [vmem:[#allocation2] sm:$0xf] %vm25, %v24
    %s27 = scalar_lea.vmem [#allocation0], 5
    %v28 = vld [vmem:[%s27] ss:$8 sm:$0xf]
    %29 = vrot.lane.b32.xlu0 %v28, 80
    %v30 = vpop.permute.xlu0 %29
    %vm31 = vcmask 786048
    %32 = vst.msk [vmem:[#allocation2] sm:$0xf] %vm31, %v30
    %s33 = scalar_lea.vmem [#allocation0], 4
    %v34 = vld [vmem:[%s33] ss:$8 sm:$0xf]
    %35 = vrot.lane.b32.xlu0 %v34, 64
    %v36 = vpop.permute.xlu0 %35
    %vm37 = vcmask 654848
    %38 = vst.msk [vmem:[#allocation2] sm:$0xf] %vm37, %v36
    %s39 = scalar_lea.vmem [#allocation0], 3
    %v40 = vld [vmem:[%s39] ss:$8 sm:$0xf]
    %41 = vrot.lane.b32.xlu0 %v40, 48
    %v42 = vpop.permute.xlu0 %41
    %vm43 = vcmask 523648
    %44 = vst.msk [vmem:[#allocation2] sm:$0xf] %vm43, %v42
    %s45 = scalar_lea.vmem [#allocation0], 2
    %v46 = vld [vmem:[%s45] ss:$8 sm:$0xf]
    %47 = vrot.lane.b32.xlu0 %v46, 32
    %v48 = vpop.permute.xlu0 %47
    %vm49 = vcmask 392448
    %50 = vst.msk [vmem:[#allocation2] sm:$0xf] %vm49, %v48
    %s51 = scalar_lea.vmem [#allocation0], 1
    %v52 = vld [vmem:[%s51] ss:$8 sm:$0xf]
    %53 = vrot.lane.b32.xlu0 %v52, 16
    %v54 = vpop.permute.xlu0 %53
    %vm55 = vcmask 261248
    %56 = vst.msk [vmem:[#allocation2] sm:$0xf] %vm55, %v54
    %s58 = sshllo.u32 0, 4
    %v60 = vld [vmem:[#allocation2] sm:%s58]
    %s61 = sshllo.u32 0, 4
    %62 = vst [vmem:[%s1] sm:%s61] %v60
    %63 = vsyncpa [#allocation1], 1

// kernel: soft_iou_loss.1
$region0: #{soft_iou_loss.1}
  #allocation0 [shape = 'u32[]', space=smem, size = 0x4, offset = 0x4, fixed_abs, tag = 'smem constant byte address 0x4 - core index']
  #allocation1 [shape = 'u32[144,128]{1,0:T(1,128)}', space=vmem, size = 0x12000, scoped, tag = 'internal scratch']
  %s0 = inlined_call_operand.vmem [shape: f32[8,128], index: 0, kind: input, shape index: {}]
  %s1 = inlined_call_operand.vmem [shape: f32[8,128], index: 1, kind: input, shape index: {}]
  %s2 = inlined_call_operand.vmem [shape: f32[1,2,8,128], index: 2, kind: output, shape index: {}]
  %s3 = sld [smem:[#allocation0]]
  $region22: #{soft_iou_loss.1} parent=0
    _
  %s5 = ssub.s32 1, %s3
  %s6 = scalar_select 0, %s5, %s3
  // Predicated region
  $region2: #{soft_iou_loss.1} parent=0 // pred_check
    _
  $region3: #{soft_iou_loss.1} parent=0 // pred_check_branch
    %8 = sbr.rel (0) target = $region5
  $region4: #{soft_iou_loss.1} parent=0 // pred_region
    %s9 = sadd.s32 0, 0
    %p10 = scmp.lt.s32.totalorder %s9, 0
    %s11 = scalar_select %p10, %s9, 0
    %p12 = scmp.lt.s32.totalorder %s11, 0
    %s13 = scalar_select %p12, %s11, 0
    %s14 = smul.addr %s13, 8
    %s15 = scalar_lea.vmem %s0, %s14
    %s16 = sadd.s32 0, 0
    %p17 = scmp.lt.s32.totalorder %s16, 0
    %s18 = scalar_select %p17, %s16, 0
  $region5: #{soft_iou_loss.1} parent=0 // pred_fallthru
    _
  // Predicated region
  $region6: #{soft_iou_loss.1} parent=0 // pred_check
    _
  $region7: #{soft_iou_loss.1} parent=0 // pred_check_branch
    %20 = sbr.rel (0) target = $region9
  $region8: #{soft_iou_loss.1} parent=0 // pred_region
    %s21 = sadd.s32 0, 0
    %p22 = scmp.lt.s32.totalorder %s21, 0
    %s23 = scalar_select %p22, %s21, 0
    %p24 = scmp.lt.s32.totalorder %s23, 0
    %s25 = scalar_select %p24, %s23, 0
    %s26 = smul.addr %s25, 8
    %s27 = scalar_lea.vmem %s1, %s26
    %s28 = sadd.s32 0, 0
    %p29 = scmp.lt.s32.totalorder %s28, 0
    %s30 = scalar_select %p29, %s28, 0
  $region9: #{soft_iou_loss.1} parent=0 // pred_fallthru
    _
  %s31 = sadd.s32 0, 0
  %p32 = scmp.lt.s32.totalorder %s31, 0
  %s33 = scalar_select %p32, %s31, 0
  %p34 = scmp.lt.s32.totalorder %s33, 0
  %s35 = scalar_select %p34, %s33, 0
  %s36 = smul.addr %s35, 8
  %s37 = scalar_lea.vmem %s0, %s36
  %s38 = sadd.s32 0, 0
  %p39 = scmp.lt.s32.totalorder %s38, 0
  %s40 = scalar_select %p39, %s38, 0
  %p41 = scmp.lt.s32.totalorder %s40, 0
  %s42 = scalar_select %p41, %s40, 0
  %s43 = smul.addr %s42, 8
  %s44 = scalar_lea.vmem %s1, %s43
  %s45 = sadd.s32 0, 0
  %p46 = scmp.lt.s32.totalorder %s45, 0
  %s47 = scalar_select %p46, %s45, 0
  %p48 = scmp.lt.s32.totalorder %s47, 0
  %s49 = scalar_select %p48, %s47, 0
  %s50 = smul.addr %s49, 8
  %s51 = scalar_lea.vmem %s0, %s50
  %s52 = sadd.s32 0, 0
  %p53 = scmp.lt.s32.totalorder %s52, 0
  %s54 = scalar_select %p53, %s52, 0
  %s55 = sadd.s32 0, 0
  %p56 = scmp.lt.s32.totalorder %s55, 0
  %s57 = scalar_select %p56, %s55, 0
  %p58 = scmp.lt.s32.totalorder %s57, 0
  %s59 = scalar_select %p58, %s57, 0
  %s60 = smul.addr %s59, 8
  %s61 = scalar_lea.vmem %s1, %s60
  %s62 = sadd.s32 0, 0
  %p63 = scmp.lt.s32.totalorder %s62, 0
  %s64 = scalar_select %p63, %s62, 0
  %p65 = scmp.eq.s32.totalorder 0, 0
  // Predicated region
  $region10: #{soft_iou_loss.1} parent=0 // pred_check
    %p66 = pneg %p65
  $region11: #{soft_iou_loss.1} parent=0 // pred_check_branch
    %68 = sbr.rel (%p66) target = $region13
  $region12: #{soft_iou_loss.1} parent=0 // pred_region
    %69 = vst [vmem:[%s2] sm:$0xff] 0.0
    %70 = vst [vmem:[%s2 + $0x8] sm:$0xff] 0.0
  $region13: #{soft_iou_loss.1} parent=0 // pred_fallthru
    _
  %v71 = vld [vmem:[%s51] sm:$0xff]
  %v72 = vld [vmem:[%s61] sm:$0xff]
  %v73 = vmul.f32 %v71, %v72
  %v74 = vadd.f32 %v71, %v72
  %v75 = vadd.f32 %v73, 0.0
  %v76 = vadd.f32 %v74, 0.0
  %v77 = vld [vmem:[%s2] sm:$0xff]
  %v78 = vadd.f32 %v77, %v75
  %79 = vst [vmem:[%s2] sm:$0xff] %v78
  %s80 = scalar_lea.vmem %s2, 8
  %v81 = vld [vmem:[%s80] sm:$0xff]
  %v82 = vadd.f32 %v81, %v76
  %83 = vst [vmem:[%s80] sm:$0xff] %v82
  // Predicated region
  $region14: #{soft_iou_loss.1} parent=0 // pred_check
    _
  $region15: #{soft_iou_loss.1} parent=0 // pred_check_branch
    %85 = sbr.rel (0) target = $region17
  $region16: #{soft_iou_loss.1} parent=0 // pred_region
    _
  $region17: #{soft_iou_loss.1} parent=0 // pred_fallthru
    _
  // Predicated region
  $region18: #{soft_iou_loss.1} parent=0 // pred_check
    _
  $region19: #{soft_iou_loss.1} parent=0 // pred_check_branch
    %87 = sbr.rel (0) target = $region21
  $region20: #{soft_iou_loss.1} parent=0 // pred_region
    _
  $region21: #{soft_iou_loss.1} parent=0 // pred_fallthru
    _

</llo_original>
